<compile_context>
chip_gen: v7x
topology: tpu7x:2x2x1
jax: 0.10.0
libtpu: 0.0.40
codegen_flags: <defaults>
</compile_context>

<pallas_src>
import math

import jax
import jax.numpy as jnp
from jax import lax
from jax.experimental import pallas as pl
from jax.experimental.pallas import tpu as pltpu


def _round_up(x, m):
    return (x + m - 1) // m * m


# ---------------------------------------------------------------------------
# Pallas kernel
# ---------------------------------------------------------------------------
def _make_sor_kernel(wopt, n_iters, dp, h_pad, l_pad):
    w_xy = wopt / 6.0

    def kernel(init_ref, bm_ref, rm_ref, out_ref):
        # (h_pad, l_pad) tiles; batch dim squeezed by BlockSpec.
        u0 = init_ref[...]
        bm = bm_ref[...]          # black * mask (zero on halo / pad cells)
        rm = rm_ref[...]          # red   * mask (zero on halo / pad cells)

        # Loop-invariant fused coefficients (built once, live in vregs):
        #   half = bmw*nbr(u) + cbm*u   ==  u + (black*mask)*(stencil(u) - u)
        #   full = rmw*nbr(h) + crm*h   ==  h + (red  *mask)*(stencil(h) - h)
        bmw = bm * w_xy
        rmw = rm * w_xy
        cbm = 1.0 - bm * wopt
        crm = 1.0 - rm * wopt

        def nbr(x):
            # Sum of the 6 zero-padded neighbours.  Zero padding comes from the
            # physical zero halo; roll wrap-around never needs masking because the
            # cells it lands on have zero update coefficients.
            s = pltpu.roll(x, shift=1, axis=0) \
                + pltpu.roll(x, shift=h_pad - 1, axis=0)          # H +/- 1 (sublane)
            s = s + pltpu.roll(x, shift=1, axis=1) \
                  + pltpu.roll(x, shift=l_pad - 1, axis=1)        # D +/- 1 (lane)
            s = s + pltpu.roll(x, shift=dp, axis=1) \
                  + pltpu.roll(x, shift=l_pad - dp, axis=1)       # W +/- 1 (lane, stride dp)
            return s

        def pair(u):
            half = bmw * nbr(u) + cbm * u       # update black & masked voxels
            return rmw * nbr(half) + crm * half  # update red & masked voxels

        def body(_, u):                          # 2x unrolled: two red/black pairs per trip
            return pair(pair(u))

        u = lax.fori_loop(0, n_iters // 2, body, u0)
        if n_iters % 2:                          # static Python check
            u = pair(u)
        out_ref[...] = u

    return kernel


# ---------------------------------------------------------------------------
# Wrapper (matches PyTorch forward semantics)
# ---------------------------------------------------------------------------
def sor_pallas(image, source=1, sink=2, domain=0, gt=False, threshold=0.05,
               w=1.5, max_iterations=120):
    """Pallas port of SuccessiveOverRelaxation_opt.forward.

    image: (bs, c, h, w, d) float32.  Returns (result (bs,1,h,w,d), iterations).
    """
    image = image.astype(jnp.float32)
    bs, c, h, ww, d = image.shape

    # ----- channel mixing (PyTorch prologue) -----
    if not gt:
        init = 0.5 * image[:, 0] + 1.0 * image[:, 1] + 0.0 * image[:, 2]
        mask = image[:, 0]
    else:
        init = 0.5 * image[:, domain] + 1.0 * image[:, source] + 0.0 * image[:, sink]
        mask = image[:, domain]

    # wopt = 2 / (1 + pi / min(init.shape)); init has shape (bs, 1, h, w, d)
    min_dim = float(min(bs, 1, h, ww, d))
    wopt = 2.0 / (1.0 + math.pi / min_dim)

    # red/black checkerboard on original coords, fused with the mask once.
    coords = (jnp.arange(h)[:, None, None]
              + jnp.arange(ww)[None, :, None]
              + jnp.arange(d)[None, None, :])
    red = (coords % 2 == 0).astype(jnp.float32)
    black = 1.0 - red
    bm = mask * black[None]
    rm = mask * red[None]

    # ----- layout: 1-voxel zero halo, fold (W,D) into the lane axis, align to (8,128) -----
    hp, wp, dp = h + 2, ww + 2, d + 2
    h_pad = _round_up(hp, 8)
    l = wp * dp
    l_pad = _round_up(l, 128)

    def pack(x):
        # (bs,h,w,d) -> zero halo -> (bs,h_pad,wp,dp) -> fold -> pad lanes -> (bs,h_pad,l_pad)
        x = jnp.pad(x, ((0, 0), (1, h_pad - h - 1), (1, 1), (1, 1)))
        x = x.reshape(bs, h_pad, l)
        if l_pad > l:
            x = jnp.pad(x, ((0, 0), (0, 0), (0, l_pad - l)))
        return x

    init_p, bm_p, rm_p = pack(init), pack(bm), pack(rm)

    kernel = _make_sor_kernel(wopt, max_iterations, dp, h_pad, l_pad)

    spec = pl.BlockSpec((pl.Squeezed(), h_pad, l_pad), lambda b: (b, 0, 0))

    out = pl.pallas_call(
        kernel,
        out_shape=jax.ShapeDtypeStruct((bs, h_pad, l_pad), jnp.float32),
        grid_spec=pltpu.PrefetchScalarGridSpec(
            num_scalar_prefetch=0,
            grid=(bs,),
            in_specs=[spec, spec, spec],
            out_specs=spec,
        ),
        compiler_params=pltpu.CompilerParams(
            dimension_semantics=("parallel",)),
    )(init_p, bm_p, rm_p)

    # ----- unpack: drop lane pad, unfold, crop halo -----
    out = out[:, :, :l].reshape(bs, h_pad, wp, dp)
    out = out[:, 1:1 + h, 1:1 + ww, 1:1 + d]
    return out.reshape(bs, 1, h, ww, d), max_iterations


# ---------------------------------------------------------------------------
# Pure-JAX reference (original, unfused math) for validation
# ---------------------------------------------------------------------------
def _shift(x, axis, offset):
    n = x.shape[axis]
    zshape = list(x.shape)
    zshape[axis] = 1
    zero = jnp.zeros(zshape, x.dtype)
    if offset == 1:
        return jnp.concatenate([zero, lax.slice_in_dim(x, 0, n - 1, axis=axis)], axis=axis)
    return jnp.concatenate([lax.slice_in_dim(x, 1, n, axis=axis), zero], axis=axis)


def _stencil(x, w_center, w_xy, axes):
    nbr = jnp.zeros_like(x)
    for ax in axes:
        nbr = nbr + _shift(x, ax, 1) + _shift(x, ax, -1)
    return w_center * x + w_xy * nbr


def sor_reference(image, max_iterations=120):
    image = image.astype(jnp.float32)
    bs, c, h, ww, d = image.shape
    init = 0.5 * image[:, 0] + 1.0 * image[:, 1] + 0.0 * image[:, 2]
    mask = image[:, 0]
    min_dim = float(min(bs, 1, h, ww, d))
    wopt = 2.0 / (1.0 + math.pi / min_dim)
    w_xy = wopt / 6.0
    w_center = 1.0 - wopt

    coords = (jnp.arange(h)[:, None, None]
              + jnp.arange(ww)[None, :, None]
              + jnp.arange(d)[None, None, :])
    red = (coords % 2 == 0).astype(jnp.float32)[None]
    black = (coords % 2 == 1).astype(jnp.float32)[None]
    inv_mask = 1.0 - mask

    u = init
    for _ in range(max_iterations):
        half = _stencil(u, w_center, w_xy, axes=(1, 2, 3))
        half = half * black + u * red
        half = half * mask + u * inv_mask
        full = _stencil(half, w_center, w_xy, axes=(1, 2, 3))
        full = full * red + half * black
        full = full * mask + u * inv_mask
        u = full
    return u.reshape(bs, 1, h, ww, d)


if __name__ == "__main__":
    key = jax.random.PRNGKey(0)
    bs, c, H, W, D = 2, 3, 8, 8, 8
    k0, k1, k2 = jax.random.split(key, 3)
    # binary segmentation channels (domain / source / sink), like the original use case
    ch0 = (jax.random.uniform(k0, (bs, H, W, D)) > 0.5).astype(jnp.float32)
    ch1 = (jax.random.uniform(k1, (bs, H, W, D)) > 0.7).astype(jnp.float32)
    ch2 = (jax.random.uniform(k2, (bs, H, W, D)) > 0.7).astype(jnp.float32)
    image = jnp.stack([ch0, ch1, ch2], axis=1)  # (bs, c, H, W, D)

    out, iters = sor_pallas(image, max_iterations=120)
    out = jax.block_until_ready(out)

    ref = sor_reference(image, max_iterations=120)
    if not jnp.allclose(out, ref, rtol=5e-4, atol=5e-4):
        raise AssertionError("Pallas SOR result does not match JAX reference")
    assert iters == 120

    print("KERNEL_OK")
</pallas_src>

<mosaic_0001>
module attributes {stable_mosaic.version = 11 : i64} {
  func.func @kernel(%arg0: i32, %arg1: memref<1x16x128xf32, #tpu.memory_space<vmem>>, %arg2: memref<1x16x128xf32, #tpu.memory_space<vmem>>, %arg3: memref<1x16x128xf32, #tpu.memory_space<vmem>>, %arg4: memref<1x16x128xf32, #tpu.memory_space<vmem>>) attributes {dimension_semantics = [#tpu.dimension_semantics<parallel>], iteration_bounds = array<i64: 2>, scalar_prefetch = 0 : i64, scratch_operands = 0 : i64, tpu.core_type = #tpu.core_type<tc>, window_params = [{transform_indices = @transform_0, window_bounds = array<i64: 1, 16, 128>}, {transform_indices = @transform_1, window_bounds = array<i64: 1, 16, 128>}, {transform_indices = @transform_2, window_bounds = array<i64: 1, 16, 128>}, {transform_indices = @transform_3, window_bounds = array<i64: 1, 16, 128>}]} {
    %c0 = arith.constant 0 : index
    %c0_0 = arith.constant 0 : index
    %c0_1 = arith.constant 0 : index
    %0 = vector.load %arg1[%c0, %c0_0, %c0_1] : memref<1x16x128xf32, #tpu.memory_space<vmem>>, vector<1x16x128xf32>
    %1 = vector.shape_cast %0 : vector<1x16x128xf32> to vector<16x128xf32>
    %c0_2 = arith.constant 0 : index
    %c0_3 = arith.constant 0 : index
    %c0_4 = arith.constant 0 : index
    %2 = vector.load %arg2[%c0_2, %c0_3, %c0_4] : memref<1x16x128xf32, #tpu.memory_space<vmem>>, vector<1x16x128xf32>
    %3 = vector.shape_cast %2 : vector<1x16x128xf32> to vector<16x128xf32>
    %c0_5 = arith.constant 0 : index
    %c0_6 = arith.constant 0 : index
    %c0_7 = arith.constant 0 : index
    %4 = vector.load %arg3[%c0_5, %c0_6, %c0_7] : memref<1x16x128xf32, #tpu.memory_space<vmem>>, vector<1x16x128xf32>
    %5 = vector.shape_cast %4 : vector<1x16x128xf32> to vector<16x128xf32>
    %cst = arith.constant 0.0804843381 : f32
    %6 = vector.broadcast %cst : f32 to vector<16x128xf32>
    %7 = arith.mulf %3, %6 : vector<16x128xf32>
    %cst_8 = arith.constant 0.0804843381 : f32
    %8 = vector.broadcast %cst_8 : f32 to vector<16x128xf32>
    %9 = arith.mulf %5, %8 : vector<16x128xf32>
    %cst_9 = arith.constant 4.829060e-01 : f32
    %10 = vector.broadcast %cst_9 : f32 to vector<16x128xf32>
    %11 = arith.mulf %3, %10 : vector<16x128xf32>
    %cst_10 = arith.constant 1.000000e+00 : f32
    %12 = vector.broadcast %cst_10 : f32 to vector<16x128xf32>
    %13 = arith.subf %12, %11 : vector<16x128xf32>
    %cst_11 = arith.constant 4.829060e-01 : f32
    %14 = vector.broadcast %cst_11 : f32 to vector<16x128xf32>
    %15 = arith.mulf %5, %14 : vector<16x128xf32>
    %cst_12 = arith.constant 1.000000e+00 : f32
    %16 = vector.broadcast %cst_12 : f32 to vector<16x128xf32>
    %17 = arith.subf %16, %15 : vector<16x128xf32>
    %c0_i32 = arith.constant 0 : i32
    %c60_i32 = arith.constant 60 : i32
    %18 = arith.addi %c0_i32, %c60_i32 : i32
    %c1_i32 = arith.constant 1 : i32
    %19 = scf.for %arg5 = %c0_i32 to %18 step %c1_i32 iter_args(%arg6 = %1) -> (vector<16x128xf32>)  : i32 {
      %c1_i32_16 = arith.constant 1 : i32
      %23 = tpu.dynamic_rotate %arg6 by %c1_i32_16 dim 0 : vector<16x128xf32>, i32 -> vector<16x128xf32>
      %c15_i32 = arith.constant 15 : i32
      %24 = tpu.dynamic_rotate %arg6 by %c15_i32 dim 0 : vector<16x128xf32>, i32 -> vector<16x128xf32>
      %25 = arith.addf %23, %24 : vector<16x128xf32>
      %c1_i32_17 = arith.constant 1 : i32
      %26 = tpu.dynamic_rotate %arg6 by %c1_i32_17 dim 1 : vector<16x128xf32>, i32 -> vector<16x128xf32>
      %27 = arith.addf %25, %26 : vector<16x128xf32>
      %c127_i32 = arith.constant 127 : i32
      %28 = tpu.dynamic_rotate %arg6 by %c127_i32 dim 1 : vector<16x128xf32>, i32 -> vector<16x128xf32>
      %29 = arith.addf %27, %28 : vector<16x128xf32>
      %c10_i32 = arith.constant 10 : i32
      %30 = tpu.dynamic_rotate %arg6 by %c10_i32 dim 1 : vector<16x128xf32>, i32 -> vector<16x128xf32>
      %31 = arith.addf %29, %30 : vector<16x128xf32>
      %c118_i32 = arith.constant 118 : i32
      %32 = tpu.dynamic_rotate %arg6 by %c118_i32 dim 1 : vector<16x128xf32>, i32 -> vector<16x128xf32>
      %33 = arith.addf %31, %32 : vector<16x128xf32>
      %34 = arith.mulf %7, %33 : vector<16x128xf32>
      %35 = arith.mulf %13, %arg6 : vector<16x128xf32>
      %36 = arith.addf %34, %35 : vector<16x128xf32>
      %c1_i32_18 = arith.constant 1 : i32
      %37 = tpu.dynamic_rotate %36 by %c1_i32_18 dim 0 : vector<16x128xf32>, i32 -> vector<16x128xf32>
      %c15_i32_19 = arith.constant 15 : i32
      %38 = tpu.dynamic_rotate %36 by %c15_i32_19 dim 0 : vector<16x128xf32>, i32 -> vector<16x128xf32>
      %39 = arith.addf %37, %38 : vector<16x128xf32>
      %c1_i32_20 = arith.constant 1 : i32
      %40 = tpu.dynamic_rotate %36 by %c1_i32_20 dim 1 : vector<16x128xf32>, i32 -> vector<16x128xf32>
      %41 = arith.addf %39, %40 : vector<16x128xf32>
      %c127_i32_21 = arith.constant 127 : i32
      %42 = tpu.dynamic_rotate %36 by %c127_i32_21 dim 1 : vector<16x128xf32>, i32 -> vector<16x128xf32>
      %43 = arith.addf %41, %42 : vector<16x128xf32>
      %c10_i32_22 = arith.constant 10 : i32
      %44 = tpu.dynamic_rotate %36 by %c10_i32_22 dim 1 : vector<16x128xf32>, i32 -> vector<16x128xf32>
      %45 = arith.addf %43, %44 : vector<16x128xf32>
      %c118_i32_23 = arith.constant 118 : i32
      %46 = tpu.dynamic_rotate %36 by %c118_i32_23 dim 1 : vector<16x128xf32>, i32 -> vector<16x128xf32>
      %47 = arith.addf %45, %46 : vector<16x128xf32>
      %48 = arith.mulf %9, %47 : vector<16x128xf32>
      %49 = arith.mulf %17, %36 : vector<16x128xf32>
      %50 = arith.addf %48, %49 : vector<16x128xf32>
      %c1_i32_24 = arith.constant 1 : i32
      %51 = tpu.dynamic_rotate %50 by %c1_i32_24 dim 0 : vector<16x128xf32>, i32 -> vector<16x128xf32>
      %c15_i32_25 = arith.constant 15 : i32
      %52 = tpu.dynamic_rotate %50 by %c15_i32_25 dim 0 : vector<16x128xf32>, i32 -> vector<16x128xf32>
      %53 = arith.addf %51, %52 : vector<16x128xf32>
      %c1_i32_26 = arith.constant 1 : i32
      %54 = tpu.dynamic_rotate %50 by %c1_i32_26 dim 1 : vector<16x128xf32>, i32 -> vector<16x128xf32>
      %55 = arith.addf %53, %54 : vector<16x128xf32>
      %c127_i32_27 = arith.constant 127 : i32
      %56 = tpu.dynamic_rotate %50 by %c127_i32_27 dim 1 : vector<16x128xf32>, i32 -> vector<16x128xf32>
      %57 = arith.addf %55, %56 : vector<16x128xf32>
      %c10_i32_28 = arith.constant 10 : i32
      %58 = tpu.dynamic_rotate %50 by %c10_i32_28 dim 1 : vector<16x128xf32>, i32 -> vector<16x128xf32>
      %59 = arith.addf %57, %58 : vector<16x128xf32>
      %c118_i32_29 = arith.constant 118 : i32
      %60 = tpu.dynamic_rotate %50 by %c118_i32_29 dim 1 : vector<16x128xf32>, i32 -> vector<16x128xf32>
      %61 = arith.addf %59, %60 : vector<16x128xf32>
      %62 = arith.mulf %7, %61 : vector<16x128xf32>
      %63 = arith.mulf %13, %50 : vector<16x128xf32>
      %64 = arith.addf %62, %63 : vector<16x128xf32>
      %c1_i32_30 = arith.constant 1 : i32
      %65 = tpu.dynamic_rotate %64 by %c1_i32_30 dim 0 : vector<16x128xf32>, i32 -> vector<16x128xf32>
      %c15_i32_31 = arith.constant 15 : i32
      %66 = tpu.dynamic_rotate %64 by %c15_i32_31 dim 0 : vector<16x128xf32>, i32 -> vector<16x128xf32>
      %67 = arith.addf %65, %66 : vector<16x128xf32>
      %c1_i32_32 = arith.constant 1 : i32
      %68 = tpu.dynamic_rotate %64 by %c1_i32_32 dim 1 : vector<16x128xf32>, i32 -> vector<16x128xf32>
      %69 = arith.addf %67, %68 : vector<16x128xf32>
      %c127_i32_33 = arith.constant 127 : i32
      %70 = tpu.dynamic_rotate %64 by %c127_i32_33 dim 1 : vector<16x128xf32>, i32 -> vector<16x128xf32>
      %71 = arith.addf %69, %70 : vector<16x128xf32>
      %c10_i32_34 = arith.constant 10 : i32
      %72 = tpu.dynamic_rotate %64 by %c10_i32_34 dim 1 : vector<16x128xf32>, i32 -> vector<16x128xf32>
      %73 = arith.addf %71, %72 : vector<16x128xf32>
      %c118_i32_35 = arith.constant 118 : i32
      %74 = tpu.dynamic_rotate %64 by %c118_i32_35 dim 1 : vector<16x128xf32>, i32 -> vector<16x128xf32>
      %75 = arith.addf %73, %74 : vector<16x128xf32>
      %76 = arith.mulf %9, %75 : vector<16x128xf32>
      %77 = arith.mulf %17, %64 : vector<16x128xf32>
      %78 = arith.addf %76, %77 : vector<16x128xf32>
      scf.yield %78 : vector<16x128xf32>
    }
    %c0_13 = arith.constant 0 : index
    %c0_14 = arith.constant 0 : index
    %c0_15 = arith.constant 0 : index
    %20 = vector.load %arg4[%c0_13, %c0_14, %c0_15] : memref<1x16x128xf32, #tpu.memory_space<vmem>>, vector<1x16x128xf32>
    %21 = vector.shape_cast %20 : vector<1x16x128xf32> to vector<16x128xf32>
    %22 = vector.shape_cast %19 : vector<16x128xf32> to vector<1x16x128xf32>
    tpu.vector_store %arg4[%c0_13, %c0_14, %c0_15], %22 {strides = array<i32>} : memref<1x16x128xf32, #tpu.memory_space<vmem>>, vector<1x16x128xf32>,
    return
  }
  func.func @transform_0(%arg0: i32) -> (i32, i32, i32) {
    %c0_i32 = arith.constant 0 : i32
    %c0_i32_0 = arith.constant 0 : i32
    %c0_i32_1 = arith.constant 0 : i32
    return %arg0, %c0_i32, %c0_i32_0 : i32, i32, i32
  }
  func.func @transform_1(%arg0: i32) -> (i32, i32, i32) {
    %c0_i32 = arith.constant 0 : i32
    %c0_i32_0 = arith.constant 0 : i32
    %c0_i32_1 = arith.constant 0 : i32
    return %arg0, %c0_i32, %c0_i32_0 : i32, i32, i32
  }
  func.func @transform_2(%arg0: i32) -> (i32, i32, i32) {
    %c0_i32 = arith.constant 0 : i32
    %c0_i32_0 = arith.constant 0 : i32
    %c0_i32_1 = arith.constant 0 : i32
    return %arg0, %c0_i32, %c0_i32_0 : i32, i32, i32
  }
  func.func @transform_3(%arg0: i32) -> (i32, i32, i32) {
    %c0_i32 = arith.constant 0 : i32
    %c0_i32_0 = arith.constant 0 : i32
    %c0_i32_1 = arith.constant 0 : i32
    return %arg0, %c0_i32, %c0_i32_0 : i32, i32, i32
  }
}

</mosaic_0001>

<llo_original>
// kernel: tpu_custom_call.1
$region0: #{tpu_custom_call.1}
  #allocation0 [shape = 'u32[]', space=smem, size = 0x4, offset = 0x4, fixed_abs, tag = 'smem constant byte address 0x4 - core index']
  #allocation1 [shape = 'u32[144,128]{1,0:T(1,128)}', space=vmem, size = 0x12000, scoped, tag = 'internal scratch']
  %s0 = inlined_call_operand.hbm [shape: f32[2,16,128], index: 0, kind: input, shape index: {}]
  %s1 = inlined_call_operand.hbm [shape: f32[2,16,128], index: 1, kind: input, shape index: {}]
  %s2 = inlined_call_operand.hbm [shape: f32[2,16,128], index: 2, kind: input, shape index: {}]
  %s3 = inlined_call_operand.hbm [shape: f32[2,16,128], index: 3, kind: output, shape index: {}]
  %s4 = sld [smem:[#allocation0]]
  $region64: #{tpu_custom_call.1} parent=0
    _
  %s6 = ssub.s32 1, %s4
  %s7 = scalar_select 0, %s6, %s4
  $region1: #{tpu_custom_call.1} parent=0
    #allocation2 [shape = 'u8[16384]{0}', space=vmem, size = 0x4000, scoped, tag = 'input window, operand 0']
    #allocation3 [shape = 's32[2]{0}', space=sflag, size = 0x8, scoped, tag = 'scoped memory for tpu_custom_call.1']
    #allocation4 [shape = 's32[2]{0}', space=sflag, size = 0x8, scoped, tag = 'scoped memory for tpu_custom_call.1']
    #allocation5 [shape = 'u8[16384]{0}', space=vmem, size = 0x4000, scoped, tag = 'input window, operand 1']
    #allocation6 [shape = 's32[2]{0}', space=sflag, size = 0x8, scoped, tag = 'scoped memory for tpu_custom_call.1']
    #allocation7 [shape = 'u8[16384]{0}', space=vmem, size = 0x4000, scoped, tag = 'input window, operand 2']
    #allocation8 [shape = 'u8[16384]{0}', space=vmem, size = 0x4000, scoped, tag = 'output window, operand 0']
    %8 = vsyncpa [#allocation3], 0
    %s9 = scalar_lea.sflag [#allocation3], 1
    %10 = vsyncpa %s9, 0
    %11 = vsyncpa [#allocation6], 0
    %s12 = scalar_lea.sflag [#allocation6], 1
    %13 = vsyncpa %s12, 0
    %14 = vsyncpa [#allocation4], 0
    %s15 = scalar_lea.sflag [#allocation4], 1
    %16 = vsyncpa %s15, 0
    loop: start=0, step=1, limit=4
    $region2: #{tpu_custom_call.1} parent=1 // loop_pre_header
      _
    $region3: #{tpu_custom_call.1} parent=1 // loop_header
      %s18 = sphi 0, %s22
      %p19 = scmp.ge.s32.totalorder %s18, 4
      %s28 = sphi 0, %s30
      %s31 = sphi 0, %s28
      %s32 = sphi 0, %s31
      %s48 = sphi 0, %s32
      %s54 = sphi 0, %s56
      %s57 = sphi 0, %s54
      %s58 = sphi 0, %s57
      %s74 = sphi 0, %s58
      %s80 = sphi 0, %s82
      %s83 = sphi 0, %s80
      %s84 = sphi 0, %s83
      %s100 = sphi 0, %s84
      %s106 = sphi 0, %s108
      %s109 = sphi 0, %s106
      %s110 = sphi 0, %s109
      %s126 = sphi 0, %s110
    $region4: #{tpu_custom_call.1} parent=1 // loop_header_branch
      %21 = sbr.rel (%p19) target = $region8
    $region5: #{tpu_custom_call.1} parent=1 // loop_body
      %s23 = ssub.s32 %s18, 1
      %s24 = ssub.s32 %s18, 2
      %s25 = sadd.s32 %s18, 1
      %s26 = ssub.s32 %s18, %s25
      %p27 = scmp.eq.s32.totalorder %s26, 0
      %s29 = sadd.s32 %s28, 1
      %s30 = scalar_select %p27, %s28, %s29
      %p33 = pneg %p27
      %p34 = scmp.eq.s32.totalorder %s18, 1
      %p35 = por %p33, %p34
      %p36 = scmp.ne.s32.totalorder %s28, %s31
      %p37 = scmp.eq.s32.totalorder %s18, 0
      %p38 = por %p36, %p37
      %p39 = scmp.ne.s32.totalorder %s28, %s31
      %p40 = scmp.eq.s32.totalorder %s23, 1
      %p41 = por %p39, %p40
      %p42 = scmp.ne.s32.totalorder %s31, %s32
      %p43 = scmp.eq.s32.totalorder %s23, 0
      %p44 = por %p42, %p43
      %p45 = scmp.ne.s32.totalorder %s31, %s32
      %p46 = scmp.eq.s32.totalorder %s24, 1
      %p47 = por %p45, %p46
      %p49 = scmp.ne.s32.totalorder %s32, %s48
      %p50 = scmp.eq.s32.totalorder %s24, 0
      %p51 = por %p49, %p50
      %s52 = ssub.s32 %s18, %s25
      %p53 = scmp.eq.s32.totalorder %s52, 0
      %s55 = sadd.s32 %s54, 1
      %s56 = scalar_select %p53, %s54, %s55
      %p59 = pneg %p53
      %p60 = scmp.eq.s32.totalorder %s18, 1
      %p61 = por %p59, %p60
      %p62 = scmp.ne.s32.totalorder %s54, %s57
      %p63 = scmp.eq.s32.totalorder %s18, 0
      %p64 = por %p62, %p63
      %p65 = scmp.ne.s32.totalorder %s54, %s57
      %p66 = scmp.eq.s32.totalorder %s23, 1
      %p67 = por %p65, %p66
      %p68 = scmp.ne.s32.totalorder %s57, %s58
      %p69 = scmp.eq.s32.totalorder %s23, 0
      %p70 = por %p68, %p69
      %p71 = scmp.ne.s32.totalorder %s57, %s58
      %p72 = scmp.eq.s32.totalorder %s24, 1
      %p73 = por %p71, %p72
      %p75 = scmp.ne.s32.totalorder %s58, %s74
      %p76 = scmp.eq.s32.totalorder %s24, 0
      %p77 = por %p75, %p76
      %s78 = ssub.s32 %s18, %s25
      %p79 = scmp.eq.s32.totalorder %s78, 0
      %s81 = sadd.s32 %s80, 1
      %s82 = scalar_select %p79, %s80, %s81
      %p85 = pneg %p79
      %p86 = scmp.eq.s32.totalorder %s18, 1
      %p87 = por %p85, %p86
      %p88 = scmp.ne.s32.totalorder %s80, %s83
      %p89 = scmp.eq.s32.totalorder %s18, 0
      %p90 = por %p88, %p89
      %p91 = scmp.ne.s32.totalorder %s80, %s83
      %p92 = scmp.eq.s32.totalorder %s23, 1
      %p93 = por %p91, %p92
      %p94 = scmp.ne.s32.totalorder %s83, %s84
      %p95 = scmp.eq.s32.totalorder %s23, 0
      %p96 = por %p94, %p95
      %p97 = scmp.ne.s32.totalorder %s83, %s84
      %p98 = scmp.eq.s32.totalorder %s24, 1
      %p99 = por %p97, %p98
      %p101 = scmp.ne.s32.totalorder %s84, %s100
      %p102 = scmp.eq.s32.totalorder %s24, 0
      %p103 = por %p101, %p102
      %s104 = ssub.s32 %s18, %s25
      %p105 = scmp.eq.s32.totalorder %s104, 0
      %s107 = sadd.s32 %s106, 1
      %s108 = scalar_select %p105, %s106, %s107
      %p111 = pneg %p105
      %p112 = scmp.eq.s32.totalorder %s18, 1
      %p113 = por %p111, %p112
      %p114 = scmp.ne.s32.totalorder %s106, %s109
      %p115 = scmp.eq.s32.totalorder %s18, 0
      %p116 = por %p114, %p115
      %p117 = scmp.ne.s32.totalorder %s106, %s109
      %p118 = scmp.eq.s32.totalorder %s23, 1
      %p119 = por %p117, %p118
      %p120 = scmp.ne.s32.totalorder %s109, %s110
      %p121 = scmp.eq.s32.totalorder %s23, 0
      %p122 = por %p120, %p121
      %p123 = scmp.ne.s32.totalorder %s109, %s110
      %p124 = scmp.eq.s32.totalorder %s24, 1
      %p125 = por %p123, %p124
      %p127 = scmp.ne.s32.totalorder %s110, %s126
      %p128 = scmp.eq.s32.totalorder %s24, 0
      %p129 = por %p127, %p128
      %p130 = scmp.le.s32.totalorder 1, %s18
      %p131 = scmp.lt.s32.totalorder %s18, 3
      %p132 = pnand %p130, %p131
      %p133 = pneg %p132
      // Predicated region
      $region9: #{tpu_custom_call.1} parent=5 // pred_check
        _
      $region10: #{tpu_custom_call.1} parent=5 // pred_check_branch
        %135 = sbr.rel (%p132) target = $region12
      $region11: #{tpu_custom_call.1} parent=5 // pred_region
        %s136 = ssub.s32 %s18, 1
      $region12: #{tpu_custom_call.1} parent=5 // pred_fallthru
        _
      %p137 = scmp.lt.s32.totalorder %s18, 2
      // Predicated region
      $region13: #{tpu_custom_call.1} parent=5 // pred_check
        %p138 = pneg %p137
      $region14: #{tpu_custom_call.1} parent=5 // pred_check_branch
        %140 = sbr.rel (%p138) target = $region16
      $region15: #{tpu_custom_call.1} parent=5 // pred_region
        // Predicated region
        $region17: #{tpu_custom_call.1} parent=15 // pred_check
          %p141 = pneg %p38
        $region18: #{tpu_custom_call.1} parent=15 // pred_check_branch
          %143 = sbr.rel (%p141) target = $region20
        $region19: #{tpu_custom_call.1} parent=15 // pred_region
          %s144 = sand.u32 %s28, 1
          %s145 = scalar_lea.sflag [#allocation3], %s144
          %s146 = sand.u32 %s28, 1
          %s147 = smul.addr %s146, 16
          %s148 = scalar_lea.vmem [#allocation2], %s147
          %s150 = ssub.s32 256, 256
          %151 = vsyncadd %s145, %s150
          %s152 = smul.addr %s18, 2
          %s153 = smul.addr %s152, 128
          %s154 = scalar_lea.hbm %s0, %s153
          %s155 = sshll.u32 %s148, 4
          %s156 = int_to_ptr.vmem [resolvable:$true] %s155
          %161 = dma.hbm_to_vmem [thread:$0]  %s154, 256, %s156, %s145, 128, 128, 8
        $region20: #{tpu_custom_call.1} parent=15 // pred_fallthru
          _
        // Predicated region
        $region21: #{tpu_custom_call.1} parent=15 // pred_check
          %p162 = pneg %p64
        $region22: #{tpu_custom_call.1} parent=15 // pred_check_branch
          %164 = sbr.rel (%p162) target = $region24
        $region23: #{tpu_custom_call.1} parent=15 // pred_region
          %s165 = sand.u32 %s18, 1
          %s166 = scalar_lea.sflag [#allocation6], %s165
          %s167 = sand.u32 %s54, 1
          %s168 = smul.addr %s167, 16
          %s169 = scalar_lea.vmem [#allocation5], %s168
          %s171 = ssub.s32 256, 256
          %172 = vsyncadd %s166, %s171
          %s173 = smul.addr %s18, 2
          %s174 = smul.addr %s173, 128
          %s175 = scalar_lea.hbm %s1, %s174
          %s176 = sshll.u32 %s169, 4
          %s177 = int_to_ptr.vmem [resolvable:$true] %s176
          %182 = dma.hbm_to_vmem [thread:$0]  %s175, 256, %s177, %s166, 128, 128, 8
        $region24: #{tpu_custom_call.1} parent=15 // pred_fallthru
          _
        // Predicated region
        $region25: #{tpu_custom_call.1} parent=15 // pred_check
          %p183 = pneg %p90
        $region26: #{tpu_custom_call.1} parent=15 // pred_check_branch
          %185 = sbr.rel (%p183) target = $region28
        $region27: #{tpu_custom_call.1} parent=15 // pred_region
          %s186 = sand.u32 %s18, 1
          %s187 = scalar_lea.sflag [#allocation6], %s186
          %s188 = sand.u32 %s80, 1
          %s189 = smul.addr %s188, 16
          %s190 = scalar_lea.vmem [#allocation7], %s189
          %s192 = ssub.s32 256, 256
          %193 = vsyncadd %s187, %s192
          %s194 = smul.addr %s18, 2
          %s195 = smul.addr %s194, 128
          %s196 = scalar_lea.hbm %s2, %s195
          %s197 = sshll.u32 %s190, 4
          %s198 = int_to_ptr.vmem [resolvable:$true] %s197
          %203 = dma.hbm_to_vmem [thread:$0]  %s196, 256, %s198, %s187, 128, 128, 8
        $region28: #{tpu_custom_call.1} parent=15 // pred_fallthru
          _
      $region16: #{tpu_custom_call.1} parent=5 // pred_fallthru
        _
      %p204 = scmp.le.s32.totalorder 1, %s18
      %p205 = scmp.lt.s32.totalorder %s18, 3
      %p206 = pnand %p204, %p205
      %p207 = pneg %p206
      // Predicated region
      $region29: #{tpu_custom_call.1} parent=5 // pred_check
        _
      $region30: #{tpu_custom_call.1} parent=5 // pred_check_branch
        %209 = sbr.rel (%p206) target = $region32
      $region31: #{tpu_custom_call.1} parent=5 // pred_region
        %s210 = ssub.s32 %s18, 1
        %s211 = sand.u32 %s31, 1
        %s212 = scalar_lea.sflag [#allocation3], %s211
        %s213 = sand.u32 %s31, 1
        %s214 = smul.addr %s213, 16
        %s215 = scalar_lea.vmem [#allocation2], %s214
        // Predicated region
        $region33: #{tpu_custom_call.1} parent=31 // pred_check
          %p216 = pneg %p44
        $region34: #{tpu_custom_call.1} parent=31 // pred_check_branch
          %218 = sbr.rel (%p216) target = $region36
        $region35: #{tpu_custom_call.1} parent=31 // pred_region
          %219 = dma.done %s212, 256
        $region36: #{tpu_custom_call.1} parent=31 // pred_fallthru
          _
        %s220 = sand.u32 %s23, 1
        %s221 = scalar_lea.sflag [#allocation6], %s220
        %s222 = sand.u32 %s57, 1
        %s223 = smul.addr %s222, 16
        %s224 = scalar_lea.vmem [#allocation5], %s223
        // Predicated region
        $region37: #{tpu_custom_call.1} parent=31 // pred_check
          %p225 = pneg %p70
        $region38: #{tpu_custom_call.1} parent=31 // pred_check_branch
          %227 = sbr.rel (%p225) target = $region40
        $region39: #{tpu_custom_call.1} parent=31 // pred_region
          %228 = dma.done %s221, 256
        $region40: #{tpu_custom_call.1} parent=31 // pred_fallthru
          _
        %s229 = sand.u32 %s23, 1
        %s230 = scalar_lea.sflag [#allocation6], %s229
        %s231 = sand.u32 %s83, 1
        %s232 = smul.addr %s231, 16
        %s233 = scalar_lea.vmem [#allocation7], %s232
        // Predicated region
        $region41: #{tpu_custom_call.1} parent=31 // pred_check
          %p234 = pneg %p96
        $region42: #{tpu_custom_call.1} parent=31 // pred_check_branch
          %236 = sbr.rel (%p234) target = $region44
        $region43: #{tpu_custom_call.1} parent=31 // pred_region
          %237 = dma.done %s230, 256
        $region44: #{tpu_custom_call.1} parent=31 // pred_fallthru
          _
        %s238 = sand.u32 %s31, 1
        %s239 = scalar_lea.sflag [#allocation3], %s238
        %s240 = sand.u32 %s31, 1
        %s241 = smul.addr %s240, 16
        %s242 = scalar_lea.vmem [#allocation2], %s241
        %p243 = pneg %p44
        %p244 = pneg %p41
        %s245 = sand.u32 %s23, 1
        %s246 = scalar_lea.sflag [#allocation6], %s245
        %s247 = sand.u32 %s57, 1
        %s248 = smul.addr %s247, 16
        %s249 = scalar_lea.vmem [#allocation5], %s248
        %p250 = pneg %p70
        %p251 = pneg %p67
        %s252 = sand.u32 %s23, 1
        %s253 = scalar_lea.sflag [#allocation6], %s252
        %s254 = sand.u32 %s83, 1
        %s255 = smul.addr %s254, 16
        %s256 = scalar_lea.vmem [#allocation7], %s255
        %p257 = pneg %p96
        %p258 = pneg %p93
        %p259 = pneg %p122
        %p260 = pneg %p119
        %s261 = sand.u32 %s109, 1
        %s262 = scalar_lea.sflag [#allocation4], %s261
        %s263 = sand.u32 %s109, 1
        %s264 = smul.addr %s263, 16
        %s265 = scalar_lea.vmem [#allocation8], %s264
        %v266 = vld [vmem:[%s215] sm:$0xff]
        %v267 = vld [vmem:[%s215 + $0x8] sm:$0xff]
        %v268 = vld [vmem:[%s224] sm:$0xff]
        %v269 = vld [vmem:[%s224 + $0x8] sm:$0xff]
        %v270 = vld [vmem:[%s233] sm:$0xff]
        %v271 = vld [vmem:[%s233 + $0x8] sm:$0xff]
        %v272 = vmul.f32 %v268, 0.08048434
        %v273 = vmul.f32 %v269, 0.08048434
        %v274 = vmul.f32 %v270, 0.08048434
        %v275 = vmul.f32 %v271, 0.08048434
        %v276 = vmul.f32 %v268, 0.482906
        %v277 = vmul.f32 %v269, 0.482906
        %v278 = vsub.f32 1.0, %v276
        %v279 = vsub.f32 1.0, %v277
        %v280 = vmul.f32 %v270, 0.482906
        %v281 = vmul.f32 %v271, 0.482906
        %v282 = vsub.f32 1.0, %v280
        %v283 = vsub.f32 1.0, %v281
        loop: start=0, step=1, limit=60
        $region45: #{tpu_custom_call.1} parent=31 // loop_pre_header
          _
        $region46: #{tpu_custom_call.1} parent=31 // loop_header
          %s285 = sphi 0, %s289
          %p286 = scmp.ge.s32.totalorder %s285, 60
          %v290 = vphi %v266, %v454
          %v291 = vphi %v267, %v455
        $region47: #{tpu_custom_call.1} parent=31 // loop_header_branch
          %288 = sbr.rel (%p286) target = $region51
        $region48: #{tpu_custom_call.1} parent=31 // loop_body
          %v292 = vrot.slane %v290, 7
          %v293 = vrot.slane %v291, 7
          %v294 = vlaneseq
          %v295 = vshrl.u32 %v294, 7
          %vm296 = vcmp.lt.s32.totalorder %v295, 1
          %v297 = vsel %vm296, %v292, %v293
          %v298 = vsel %vm296, %v293, %v292
          %v299 = vrot.slane %v290, 1
          %v300 = vrot.slane %v291, 1
          %vm301 = vcmp.lt.s32.totalorder %v295, 7
          %v302 = vsel %vm301, %v299, %v300
          %v303 = vsel %vm301, %v300, %v299
          %v304 = vadd.f32 %v298, %v302
          %v305 = vadd.f32 %v297, %v303
          %306 = vrot.lane.b32.xlu0 %v290, 1
          %v307 = vpop.permute.xlu0 %306
          %308 = vrot.lane.b32.xlu0 %v291, 1
          %v309 = vpop.permute.xlu0 %308
          %v310 = vadd.f32 %v304, %v307
          %v311 = vadd.f32 %v305, %v309
          %312 = vrot.lane.b32.xlu0 %v290, 127
          %v313 = vpop.permute.xlu0 %312
          %314 = vrot.lane.b32.xlu0 %v291, 127
          %v315 = vpop.permute.xlu0 %314
          %v316 = vadd.f32 %v310, %v313
          %v317 = vadd.f32 %v311, %v315
          %318 = vrot.lane.b32.xlu0 %v290, 10
          %v319 = vpop.permute.xlu0 %318
          %320 = vrot.lane.b32.xlu0 %v291, 10
          %v321 = vpop.permute.xlu0 %320
          %v322 = vadd.f32 %v316, %v319
          %v323 = vadd.f32 %v317, %v321
          %324 = vrot.lane.b32.xlu0 %v290, 118
          %v325 = vpop.permute.xlu0 %324
          %326 = vrot.lane.b32.xlu0 %v291, 118
          %v327 = vpop.permute.xlu0 %326
          %v328 = vadd.f32 %v322, %v325
          %v329 = vadd.f32 %v323, %v327
          %v330 = vmul.f32 %v272, %v328
          %v331 = vmul.f32 %v273, %v329
          %v332 = vmul.f32 %v278, %v290
          %v333 = vmul.f32 %v279, %v291
          %v334 = vadd.f32 %v330, %v332
          %v335 = vadd.f32 %v331, %v333
          %v336 = vrot.slane %v334, 7
          %v337 = vrot.slane %v335, 7
          %v338 = vsel %vm296, %v336, %v337
          %v339 = vsel %vm296, %v337, %v336
          %v340 = vrot.slane %v334, 1
          %v341 = vrot.slane %v335, 1
          %v342 = vsel %vm301, %v340, %v341
          %v343 = vsel %vm301, %v341, %v340
          %v344 = vadd.f32 %v339, %v342
          %v345 = vadd.f32 %v338, %v343
          %346 = vrot.lane.b32.xlu0 %v334, 1
          %v347 = vpop.permute.xlu0 %346
          %348 = vrot.lane.b32.xlu0 %v335, 1
          %v349 = vpop.permute.xlu0 %348
          %v350 = vadd.f32 %v344, %v347
          %v351 = vadd.f32 %v345, %v349
          %352 = vrot.lane.b32.xlu0 %v334, 127
          %v353 = vpop.permute.xlu0 %352
          %354 = vrot.lane.b32.xlu0 %v335, 127
          %v355 = vpop.permute.xlu0 %354
          %v356 = vadd.f32 %v350, %v353
          %v357 = vadd.f32 %v351, %v355
          %358 = vrot.lane.b32.xlu0 %v334, 10
          %v359 = vpop.permute.xlu0 %358
          %360 = vrot.lane.b32.xlu0 %v335, 10
          %v361 = vpop.permute.xlu0 %360
          %v362 = vadd.f32 %v356, %v359
          %v363 = vadd.f32 %v357, %v361
          %364 = vrot.lane.b32.xlu0 %v334, 118
          %v365 = vpop.permute.xlu0 %364
          %366 = vrot.lane.b32.xlu0 %v335, 118
          %v367 = vpop.permute.xlu0 %366
          %v368 = vadd.f32 %v362, %v365
          %v369 = vadd.f32 %v363, %v367
          %v370 = vmul.f32 %v274, %v368
          %v371 = vmul.f32 %v275, %v369
          %v372 = vmul.f32 %v282, %v334
          %v373 = vmul.f32 %v283, %v335
          %v374 = vadd.f32 %v370, %v372
          %v375 = vadd.f32 %v371, %v373
          %v376 = vrot.slane %v374, 7
          %v377 = vrot.slane %v375, 7
          %v378 = vsel %vm296, %v376, %v377
          %v379 = vsel %vm296, %v377, %v376
          %v380 = vrot.slane %v374, 1
          %v381 = vrot.slane %v375, 1
          %v382 = vsel %vm301, %v380, %v381
          %v383 = vsel %vm301, %v381, %v380
          %v384 = vadd.f32 %v379, %v382
          %v385 = vadd.f32 %v378, %v383
          %386 = vrot.lane.b32.xlu0 %v374, 1
          %v387 = vpop.permute.xlu0 %386
          %388 = vrot.lane.b32.xlu0 %v375, 1
          %v389 = vpop.permute.xlu0 %388
          %v390 = vadd.f32 %v384, %v387
          %v391 = vadd.f32 %v385, %v389
          %392 = vrot.lane.b32.xlu0 %v374, 127
          %v393 = vpop.permute.xlu0 %392
          %394 = vrot.lane.b32.xlu0 %v375, 127
          %v395 = vpop.permute.xlu0 %394
          %v396 = vadd.f32 %v390, %v393
          %v397 = vadd.f32 %v391, %v395
          %398 = vrot.lane.b32.xlu0 %v374, 10
          %v399 = vpop.permute.xlu0 %398
          %400 = vrot.lane.b32.xlu0 %v375, 10
          %v401 = vpop.permute.xlu0 %400
          %v402 = vadd.f32 %v396, %v399
          %v403 = vadd.f32 %v397, %v401
          %404 = vrot.lane.b32.xlu0 %v374, 118
          %v405 = vpop.permute.xlu0 %404
          %406 = vrot.lane.b32.xlu0 %v375, 118
          %v407 = vpop.permute.xlu0 %406
          %v408 = vadd.f32 %v402, %v405
          %v409 = vadd.f32 %v403, %v407
          %v410 = vmul.f32 %v272, %v408
          %v411 = vmul.f32 %v273, %v409
          %v412 = vmul.f32 %v278, %v374
          %v413 = vmul.f32 %v279, %v375
          %v414 = vadd.f32 %v410, %v412
          %v415 = vadd.f32 %v411, %v413
          %v416 = vrot.slane %v414, 7
          %v417 = vrot.slane %v415, 7
          %v418 = vsel %vm296, %v416, %v417
          %v419 = vsel %vm296, %v417, %v416
          %v420 = vrot.slane %v414, 1
          %v421 = vrot.slane %v415, 1
          %v422 = vsel %vm301, %v420, %v421
          %v423 = vsel %vm301, %v421, %v420
          %v424 = vadd.f32 %v419, %v422
          %v425 = vadd.f32 %v418, %v423
          %426 = vrot.lane.b32.xlu0 %v414, 1
          %v427 = vpop.permute.xlu0 %426
          %428 = vrot.lane.b32.xlu0 %v415, 1
          %v429 = vpop.permute.xlu0 %428
          %v430 = vadd.f32 %v424, %v427
          %v431 = vadd.f32 %v425, %v429
          %432 = vrot.lane.b32.xlu0 %v414, 127
          %v433 = vpop.permute.xlu0 %432
          %434 = vrot.lane.b32.xlu0 %v415, 127
          %v435 = vpop.permute.xlu0 %434
          %v436 = vadd.f32 %v430, %v433
          %v437 = vadd.f32 %v431, %v435
          %438 = vrot.lane.b32.xlu0 %v414, 10
          %v439 = vpop.permute.xlu0 %438
          %440 = vrot.lane.b32.xlu0 %v415, 10
          %v441 = vpop.permute.xlu0 %440
          %v442 = vadd.f32 %v436, %v439
          %v443 = vadd.f32 %v437, %v441
          %444 = vrot.lane.b32.xlu0 %v414, 118
          %v445 = vpop.permute.xlu0 %444
          %446 = vrot.lane.b32.xlu0 %v415, 118
          %v447 = vpop.permute.xlu0 %446
          %v448 = vadd.f32 %v442, %v445
          %v449 = vadd.f32 %v443, %v447
          %v450 = vmul.f32 %v274, %v448
          %v451 = vmul.f32 %v275, %v449
          %v452 = vmul.f32 %v282, %v414
          %v453 = vmul.f32 %v283, %v415
          %v454 = vadd.f32 %v450, %v452
          %v455 = vadd.f32 %v451, %v453
        $region49: #{tpu_custom_call.1} parent=31 // loop_footer
          %s289 = sadd.s32 1, %s285
        $region50: #{tpu_custom_call.1} parent=31 // loop_footer_branch
          %284 = sbr.rel target = $region46
        $region51: #{tpu_custom_call.1} parent=31 // loop_exit
          _
        %456 = vst [vmem:[%s265] sm:$0xff] %v290
        %457 = vst [vmem:[%s265 + $0x8] sm:$0xff] %v291
        %s458 = sand.u32 %s109, 1
        %s459 = scalar_lea.sflag [#allocation4], %s458
        %s460 = sand.u32 %s109, 1
        %s461 = smul.addr %s460, 16
        %s462 = scalar_lea.vmem [#allocation8], %s461
        // Predicated region
        $region52: #{tpu_custom_call.1} parent=31 // pred_check
          %p463 = pneg %p119
        $region53: #{tpu_custom_call.1} parent=31 // pred_check_branch
          %465 = sbr.rel (%p463) target = $region55
        $region54: #{tpu_custom_call.1} parent=31 // pred_region
          %s467 = ssub.s32 256, 256
          %468 = vsyncadd %s459, %s467
          %s469 = smul.addr %s23, 2
          %s470 = smul.addr %s469, 128
          %s471 = scalar_lea.hbm %s3, %s470
          %s472 = sshll.u32 %s462, 4
          %s473 = int_to_ptr.vmem [resolvable:$true] %s472
          %478 = dma.vmem_to_hbm [thread:$0]  %s473, 256, %s471, %s459, 128, 128, 8
        $region55: #{tpu_custom_call.1} parent=31 // pred_fallthru
          _
      $region32: #{tpu_custom_call.1} parent=5 // pred_fallthru
        _
      %p479 = scmp.le.s32.totalorder 2, %s18
      // Predicated region
      $region56: #{tpu_custom_call.1} parent=5 // pred_check
        %p480 = pneg %p479
      $region57: #{tpu_custom_call.1} parent=5 // pred_check_branch
        %482 = sbr.rel (%p480) target = $region59
      $region58: #{tpu_custom_call.1} parent=5 // pred_region
        %s483 = ssub.s32 %s18, 2
        // Predicated region
        $region60: #{tpu_custom_call.1} parent=58 // pred_check
          %p484 = pneg %p125
        $region61: #{tpu_custom_call.1} parent=58 // pred_check_branch
          %486 = sbr.rel (%p484) target = $region63
        $region62: #{tpu_custom_call.1} parent=58 // pred_region
          %s487 = sand.u32 %s110, 1
          %s488 = scalar_lea.sflag [#allocation4], %s487
          %s489 = sand.u32 %s110, 1
          %s490 = smul.addr %s489, 16
          %s491 = scalar_lea.vmem [#allocation8], %s490
          %492 = dma.done %s488, 256
        $region63: #{tpu_custom_call.1} parent=58 // pred_fallthru
          _
      $region59: #{tpu_custom_call.1} parent=5 // pred_fallthru
        _
    $region6: #{tpu_custom_call.1} parent=1 // loop_footer
      %s22 = sadd.s32 1, %s18
    $region7: #{tpu_custom_call.1} parent=1 // loop_footer_branch
      %17 = sbr.rel target = $region3
    $region8: #{tpu_custom_call.1} parent=1 // loop_exit
      _
    %493 = vsyncpa [#allocation3], 1
    %s494 = scalar_lea.sflag [#allocation3], 1
    %495 = vsyncpa %s494, 1
    %496 = vsyncpa [#allocation6], 1
    %s497 = scalar_lea.sflag [#allocation6], 1
    %498 = vsyncpa %s497, 1
    %499 = vsyncpa [#allocation4], 1
    %s500 = scalar_lea.sflag [#allocation4], 1
    %501 = vsyncpa %s500, 1

</llo_original>
